<compile_context>
chip_gen: v7x
topology: tpu7x:2x2x1
jax: 0.10.0
libtpu: 0.0.40
codegen_flags: <defaults>
</compile_context>

<pallas_src>
import functools

import jax
import jax.numpy as jnp
from jax.experimental import pallas as pl
from jax.experimental.pallas import tpu as pltpu

# Candidate lane-dense last dims (all multiples of the 128-lane vreg width).
_LANE_CHOICES = (4096, 2048, 1024, 512, 256, 128)


def _copy_kernel(x_ref, o_ref):
    # Pure pass-through: the only "forward" semantics the base Encoder admits.
    o_ref[...] = x_ref[...]


@functools.lru_cache(maxsize=1)
def _block_bytes_target() -> int:
    """Per-generation block-size target (bytes per input block).

    v5e: 16 MiB scoped-VMEM default -> 2 MiB blocks (in+out double-buffered
         = 8 MiB) stay well clear of the ceiling and are already ~roofline
         at ~820 GB/s HBM.
    v6e / v7x: 32 MiB scoped default -> 4 MiB blocks (16 MiB double-buffered)
         halve the per-grid-step (~0.35 us) overhead, which matters most at
         v7x's 3.2 TB/s HBM.
    """
    try:
        kind = jax.devices()[0].device_kind.lower()
    except Exception:  # pragma: no cover - defensive, e.g. no backend yet
        return 2 << 20
    if "v5 lite" in kind or "v5e" in kind or "v5litepod" in kind:
        return 2 << 20
    return 4 << 20


def _lane_dense_copy(x2d: jax.Array, tile_rows: int) -> jax.Array:
    """Streaming HBM->HBM copy of a (rows, lanes) lane-dense array."""
    rows, lanes = x2d.shape
    grid = (pl.cdiv(rows, tile_rows),)  # uneven last block: Pallas masks it
    return pl.pallas_call(
        _copy_kernel,
        out_shape=jax.ShapeDtypeStruct((rows, lanes), x2d.dtype),
        grid=grid,
        in_specs=[pl.BlockSpec((tile_rows, lanes), lambda i: (i, 0))],
        out_specs=pl.BlockSpec((tile_rows, lanes), lambda i: (i, 0)),
        compiler_params=pltpu.CompilerParams(
            # Lets v7x shard the grid across its two TensorCores; a no-op on
            # v5e/v6e.  The copy stays HBM-bound either way.
            dimension_semantics=("parallel",),
        ),
    )(x2d)


def encoder_forward(x: jax.Array) -> jax.Array:
    """Concrete minimal Encoder.forward: identity pass-through.

    Lane-dense-friendly shapes go through a near-roofline Pallas copy (kept
    as the runnable kernel demonstration); everything else short-circuits to
    `return x`, the true zero-cost identity.
    """
    total = x.size
    if total == 0:
        return x  # zero-size edge case: nothing to copy, avoid 0-div

    lanes = next((l for l in _LANE_CHOICES if total % l == 0), None)
    if lanes is None:
        # Padding + slicing back would each add a full-tensor HBM pass; the
        # correct zero-cost path is simply returning the input unchanged.
        return x

    rows = total // lanes
    itemsize = jnp.dtype(x.dtype).itemsize

    # dtype-aware row tile: keep the block near the per-generation byte
    # target so sub-32-bit dtypes don't silently shrink the effective block.
    max_rows = max(8, _block_bytes_target() // (lanes * itemsize))
    max_rows = (max_rows // 8) * 8          # multiple of 8 sublanes
    tile_rows = rows if rows <= max_rows else max_rows
    # (8,128) rule: tile_rows is either a multiple of 8 or equals the full
    # row extent; `lanes` is always a multiple of 128.

    x2d = x.reshape(rows, lanes)            # layout view, no extra HBM pass
    out2d = _lane_dense_copy(x2d, tile_rows)
    return out2d.reshape(x.shape)


if __name__ == "__main__":
    key = jax.random.PRNGKey(0)
    # Small NCHW input consistent with a conv-style encoder interface.
    x = jax.random.normal(key, (2, 4, 16, 16), dtype=jnp.float32)

    fwd = jax.jit(encoder_forward)
    y = fwd(x)
    jax.block_until_ready(y)

    # Sanity check: identity semantics (the only well-defined behavior of the
    # abstract Encoder base beyond raising NotImplementedError).
    assert y.shape == x.shape and y.dtype == x.dtype
    assert bool(jnp.allclose(y, x))

    print("KERNEL_OK")
</pallas_src>

<mosaic_0001>
module attributes {stable_mosaic.version = 11 : i64} {
  func.func @_copy_kernel(%arg0: i32, %arg1: memref<1x2048xf32, #tpu.memory_space<vmem>>, %arg2: memref<1x2048xf32, #tpu.memory_space<vmem>>) attributes {dimension_semantics = [#tpu.dimension_semantics<parallel>], iteration_bounds = array<i64: 1>, scalar_prefetch = 0 : i64, scratch_operands = 0 : i64, tpu.core_type = #tpu.core_type<tc>, window_params = [{transform_indices = @transform_0, window_bounds = array<i64: 1, 2048>}, {transform_indices = @transform_1, window_bounds = array<i64: 1, 2048>}]} {
    %c0 = arith.constant 0 : index
    %c0_0 = arith.constant 0 : index
    %0 = vector.load %arg1[%c0, %c0_0] : memref<1x2048xf32, #tpu.memory_space<vmem>>, vector<1x2048xf32>
    %c0_1 = arith.constant 0 : index
    %c0_2 = arith.constant 0 : index
    %1 = vector.load %arg2[%c0_1, %c0_2] : memref<1x2048xf32, #tpu.memory_space<vmem>>, vector<1x2048xf32>
    tpu.vector_store %arg2[%c0_1, %c0_2], %0 {strides = array<i32>} : memref<1x2048xf32, #tpu.memory_space<vmem>>, vector<1x2048xf32>,
    return
  }
  func.func @transform_0(%arg0: i32) -> (i32, i32) {
    %c0_i32 = arith.constant 0 : i32
    %c0_i32_0 = arith.constant 0 : i32
    return %arg0, %c0_i32 : i32, i32
  }
  func.func @transform_1(%arg0: i32) -> (i32, i32) {
    %c0_i32 = arith.constant 0 : i32
    %c0_i32_0 = arith.constant 0 : i32
    return %arg0, %c0_i32 : i32, i32
  }
}

</mosaic_0001>

<llo_original>
// kernel: encoder_forward.1
$region0: #{encoder_forward.1}
  #allocation0 [shape = 'u32[]', space=smem, size = 0x4, offset = 0x4, fixed_abs, tag = 'smem constant byte address 0x4 - core index']
  #allocation1 [shape = 'u32[144,128]{1,0:T(1,128)}', space=vmem, size = 0x12000, scoped, tag = 'internal scratch']
  %s0 = inlined_call_operand.vmem [shape: f32[1,2048], index: 0, kind: input, shape index: {}]
  %s1 = inlined_call_operand.vmem [shape: f32[1,2048], index: 1, kind: output, shape index: {}]
  %s2 = sld [smem:[#allocation0]]
  $region14: #{encoder_forward.1} parent=0
    _
  %s4 = ssub.s32 1, %s2
  %s5 = scalar_select 0, %s4, %s2
  // Predicated region
  $region2: #{encoder_forward.1} parent=0 // pred_check
    _
  $region3: #{encoder_forward.1} parent=0 // pred_check_branch
    %7 = sbr.rel (0) target = $region5
  $region4: #{encoder_forward.1} parent=0 // pred_region
    _
  $region5: #{encoder_forward.1} parent=0 // pred_fallthru
    _
  %v8 = vld [vmem:[%s0] sm:$0xff]
  %v9 = vld [vmem:[%s0 + $0x8] sm:$0xff]
  %10 = vst [vmem:[%s1] sm:$0xff] %v8
  %11 = vst [vmem:[%s1 + $0x8] sm:$0xff] %v9
  // Predicated region
  $region6: #{encoder_forward.1} parent=0 // pred_check
    _
  $region7: #{encoder_forward.1} parent=0 // pred_check_branch
    %13 = sbr.rel (0) target = $region9
  $region8: #{encoder_forward.1} parent=0 // pred_region
    _
  $region9: #{encoder_forward.1} parent=0 // pred_fallthru
    _
  // Predicated region
  $region10: #{encoder_forward.1} parent=0 // pred_check
    _
  $region11: #{encoder_forward.1} parent=0 // pred_check_branch
    %15 = sbr.rel (0) target = $region13
  $region12: #{encoder_forward.1} parent=0 // pred_region
    _
  $region13: #{encoder_forward.1} parent=0 // pred_fallthru
    _

</llo_original>
